<compile_context>
chip_gen: v7x
topology: tpu7x:2x2x1
jax: 0.10.0
libtpu: 0.0.40
codegen_flags: <defaults>
</compile_context>

<pallas_src>
import functools

import jax
import jax.numpy as jnp
from jax.experimental import pallas as pl
from jax.experimental.pallas import tpu as pltpu


# --------------------------------------------------------------------------
# Roll-direction probe (makes the shift sign convention explicit & robust)
# --------------------------------------------------------------------------
def _roll_matches_jnp():
    """True iff pltpu.roll(x, s)[i] == x[(i - s) mod n] (i.e. jnp.roll semantics)."""
    def k(x_ref, o_ref):
        o_ref[...] = pltpu.roll(x_ref[...], 1, axis=1)

    x = jnp.arange(8 * 128, dtype=jnp.float32).reshape(8, 128)
    y = pl.pallas_call(k, out_shape=jax.ShapeDtypeStruct((8, 128), jnp.float32))(x)
    return bool(y[0, 1] == x[0, 0])


# --------------------------------------------------------------------------
# Fused 3x3-conv-chain Pallas kernel
# --------------------------------------------------------------------------
def _conv_chain_kernel(x_ref, *refs, h, w, nb, n_convs, acts, roll_matches_jnp):
    """Chain of 3x3 'same' convs (+ folded-BN bias + activation) on one block.

    x_ref : (nb, cin0, h*w)  bf16, flattened spatial on the lane axis
    refs  : w_0, b_0, ..., w_{L-1}, b_{L-1}, o_ref
      w_l : (9, cout_l, cin_l) bf16, tap-major (t = (dy+1)*3 + (dx+1))
      b_l : (cout_l, 1)        f32 (BN folded)
      o   : (nb, cout_{L-1}, h*w) bf16
    """
    o_ref = refs[2 * n_convs]
    hw = h * w
    log2w = w.bit_length() - 1                      # spatial sizes are powers of 2

    # Hoisted boundary predicates (<= 2 ANDs + one select per tap).
    idx = jax.lax.broadcasted_iota(jnp.int32, (1, hw), 1)
    row = idx >> log2w
    col = idx & (w - 1)
    row_ok = {-1: row >= 1, 0: None, 1: row < (h - 1)}
    col_ok = {-1: col >= 1, 0: None, 1: col < (w - 1)}
    masks = {}
    for dy in (-1, 0, 1):
        for dx in (-1, 0, 1):
            m = row_ok[dy]
            if col_ok[dx] is not None:
                m = col_ok[dx] if m is None else (m & col_ok[dx])
            masks[(dy, dx)] = m
    zero = jnp.zeros((), jnp.bfloat16)

    for n in range(nb):                             # static unroll over images
        cur = x_ref[n]                              # (cin, hw) bf16
        for l in range(n_convs):
            wt_ref = refs[2 * l]
            b_ref = refs[2 * l + 1]
            acc = None
            t = 0
            for dy in (-1, 0, 1):
                for dx in (-1, 0, 1):
                    if dy == 0 and dx == 0:
                        tap = cur
                    else:
                        s = dy * w + dx             # want tap[q] = cur[q + s]
                        shift = (-s) % hw if roll_matches_jnp else s % hw
                        tap = pltpu.roll(cur, shift, axis=1)
                        tap = jnp.where(masks[(dy, dx)], tap, zero)
                    part = jnp.dot(wt_ref[t], tap,
                                   preferred_element_type=jnp.float32)
                    acc = part if acc is None else acc + part
                    t += 1
            y = acc + b_ref[...]                    # folded BN / conv bias (f32)
            y = jnp.maximum(y, 0.0) if acts[l] == "relu" else jnp.tanh(y)
            cur = y.astype(jnp.bfloat16)
        o_ref[n] = cur


def conv3x3_chain(x_flat, convs, size, acts, *, roll_matches_jnp,
                  batch_in_one_step=False):
    """Run len(convs) chained 3x3 'same' convs over (N, Cin, size*size) bf16."""
    n, cin0, hw = x_flat.shape
    assert hw == size * size and (size & (size - 1)) == 0, (size, hw)
    assert len(convs) == len(acts) and all(a in ("relu", "tanh") for a in acts)
    assert convs[0]["w"].shape[2] == cin0

    nb = n if batch_in_one_step else 1
    cout_last = convs[-1]["w"].shape[1]

    in_specs = [pl.BlockSpec((nb, cin0, hw), lambda i: (i, 0, 0))]
    args = [x_flat]
    for cp in convs:
        in_specs.append(pl.BlockSpec(cp["w"].shape, lambda i: (0, 0, 0)))
        in_specs.append(pl.BlockSpec(cp["b"].shape, lambda i: (0, 0)))
        args += [cp["w"], cp["b"]]

    kernel = functools.partial(
        _conv_chain_kernel, h=size, w=size, nb=nb, n_convs=len(convs),
        acts=tuple(acts), roll_matches_jnp=roll_matches_jnp)

    return pl.pallas_call(
        kernel,
        out_shape=jax.ShapeDtypeStruct((n, cout_last, hw), jnp.bfloat16),
        grid=(n // nb,),
        in_specs=in_specs,
        out_specs=pl.BlockSpec((nb, cout_last, hw), lambda i: (i, 0, 0)),
        compiler_params=pltpu.CompilerParams(
            # TODO(synk): when N == 1 on v7x, add a second parallel split (hw
            # halves with 1-row halo) so the second TensorCore isn't idle.
            dimension_semantics=("parallel",),
            vmem_limit_bytes=32 * 1024 * 1024),
    )(*args)


# --------------------------------------------------------------------------
# XLA-side pieces
# --------------------------------------------------------------------------
def _initial_projection(params, x_latent):
    """(N, latent) -> (N, C0, 64) bf16.  Tiny matmul: left to XLA (review)."""
    h = jnp.dot(x_latent.astype(jnp.bfloat16), params["proj_w"],
                preferred_element_type=jnp.float32)
    h = jnp.maximum(h + params["proj_b"], 0.0).astype(jnp.bfloat16)
    n = x_latent.shape[0]
    c0 = params["proj_w"].shape[1] // 64
    return h.reshape(n, c0, 64)


def nearest_upsample_2x(h_flat, size):
    # TODO(synk): kept as an XLA op; fusing the 2x lane interleave into the
    # consumer Pallas kernel is not worth the lowering risk at these sizes.
    n, c, hw = h_flat.shape
    x = h_flat.reshape(n, c, size, size)
    x = jnp.repeat(jnp.repeat(x, 2, axis=2), 2, axis=3)
    return x.reshape(n, c, 4 * hw)


# --------------------------------------------------------------------------
# Parameter construction (deterministic, synthetic; BN folded, bf16 weights)
# --------------------------------------------------------------------------
def _conv_params(key, cin, cout, *, with_bn, eps=1e-5):
    kw, kg, kb = jax.random.split(key, 3)
    w = jax.random.normal(kw, (9, cout, cin), jnp.float32) / jnp.sqrt(9.0 * cin)
    if with_bn:
        gamma = 1.0 + 0.1 * jax.random.normal(kg, (cout,), jnp.float32)
        beta = 0.1 * jax.random.normal(kb, (cout,), jnp.float32)
        scale = gamma / jnp.sqrt(1.0 + eps)          # eval mode: mean=0, var=1
        bias = beta
    else:
        scale = jnp.ones((cout,), jnp.float32)
        bias = 0.01 * jax.random.normal(kb, (cout,), jnp.float32)
    w_folded = (w * scale[None, :, None]).astype(jnp.bfloat16)
    return {"w": w_folded, "b": bias.reshape(cout, 1)}


def init_decoder_params(key, latent_dim, out_channels, layers, base_channels):
    init_channels = base_channels * 8
    init_size = 8
    chans = [init_channels, base_channels * 4, base_channels * 2,
             base_channels, base_channels]
    n_layers = [layers[0], layers[1], layers[2],
                layers[3] if len(layers) > 3 else 1]
    keys = jax.random.split(key, 2 + sum(n_layers) + 2)

    proj_out = init_channels * init_size * init_size
    proj_w = (jax.random.normal(keys[0], (latent_dim, proj_out), jnp.float32)
              / jnp.sqrt(float(latent_dim))).astype(jnp.bfloat16)
    proj_b = 0.01 * jax.random.normal(keys[1], (1, proj_out), jnp.float32)

    ki = 2
    up_blocks = []
    for blk in range(4):
        cin, cout = chans[blk], chans[blk + 1]
        convs = []
        for l in range(n_layers[blk]):
            convs.append(_conv_params(keys[ki], cin if l == 0 else cout, cout,
                                      with_bn=True))
            ki += 1
        up_blocks.append(convs)

    final1 = _conv_params(keys[ki], base_channels, base_channels // 2, with_bn=True)
    ki += 1
    final2 = _conv_params(keys[ki], base_channels // 2, out_channels, with_bn=False)

    return {"proj_w": proj_w, "proj_b": proj_b,
            "up_blocks": up_blocks, "final1": final1, "final2": final2}


# --------------------------------------------------------------------------
# Forward pass (mirrors EnhancedDecoder.forward with skip_features=None)
# --------------------------------------------------------------------------
def enhanced_decoder_forward(params, x_latent, *, roll_matches_jnp=True):
    n = x_latent.shape[0]
    size = 8

    h = _initial_projection(params, x_latent)        # (N, C0, 64) bf16

    blocks = params["up_blocks"]
    for bi, block in enumerate(blocks):
        h = nearest_upsample_2x(h, size)
        size *= 2
        if bi == len(blocks) - 1:
            # Fuse up4's conv(s) with both final_conv layers (all at 128x128).
            convs = list(block) + [params["final1"], params["final2"]]
            acts = ["relu"] * len(block) + ["relu", "tanh"]
        else:
            convs = list(block)
            acts = ["relu"] * len(block)
        h = conv3x3_chain(h, convs, size, acts,
                          roll_matches_jnp=roll_matches_jnp,
                          batch_in_one_step=(size * size <= 1024))

    out_ch = params["final2"]["w"].shape[1]
    return h.reshape(n, out_ch, size, size).astype(jnp.float32)


# --------------------------------------------------------------------------
# Pure-XLA reference (lax.conv_general_dilated) with matching bf16 boundaries
# --------------------------------------------------------------------------
def _reference_conv(h_nchw, conv_p, act):
    w9 = conv_p["w"].astype(jnp.float32)             # (9, cout, cin)
    cout, cin = w9.shape[1], w9.shape[2]
    k = jnp.transpose(w9.reshape(3, 3, cout, cin), (2, 3, 0, 1))   # OIHW
    y = jax.lax.conv_general_dilated(
        h_nchw.astype(jnp.float32), k, window_strides=(1, 1), padding="SAME",
        dimension_numbers=("NCHW", "OIHW", "NCHW"))
    y = y + conv_p["b"].reshape(1, cout, 1, 1)
    y = jnp.maximum(y, 0.0) if act == "relu" else jnp.tanh(y)
    return y.astype(jnp.bfloat16)


def reference_forward(params, x_latent):
    n = x_latent.shape[0]
    c0 = params["proj_w"].shape[1] // 64
    h = _initial_projection(params, x_latent).reshape(n, c0, 8, 8)
    for block in params["up_blocks"]:
        h = jnp.repeat(jnp.repeat(h, 2, axis=2), 2, axis=3)
        for conv_p in block:
            h = _reference_conv(h, conv_p, "relu")
    h = _reference_conv(h, params["final1"], "relu")
    h = _reference_conv(h, params["final2"], "tanh")
    return h.astype(jnp.float32)


# --------------------------------------------------------------------------
if __name__ == "__main__":
    latent_dim = 32
    out_channels = 3
    base_channels = 8          # small demo: spatial still goes 8 -> 128
    layers = [1, 1, 1, 1]
    batch = 2

    roll_jnp = _roll_matches_jnp()

    key_params, key_x = jax.random.split(jax.random.PRNGKey(0))
    params = init_decoder_params(key_params, latent_dim, out_channels,
                                 layers, base_channels)
    x = jax.random.normal(key_x, (batch, latent_dim), jnp.float32)

    fwd = jax.jit(functools.partial(enhanced_decoder_forward,
                                    roll_matches_jnp=roll_jnp))
    out = jax.block_until_ready(fwd(params, x))

    assert out.shape == (batch, out_channels, 128, 128), out.shape
    assert bool(jnp.all(jnp.isfinite(out)))
    assert bool(jnp.all(jnp.abs(out) <= 1.0 + 1e-5))   # tanh range

    # Numerical validation vs a pure-XLA conv reference with the same bf16
    # layer-boundary casts (catches tap-order / roll-direction / mask bugs).
    ref = jax.block_until_ready(jax.jit(reference_forward)(params, x))
    err = float(jnp.max(jnp.abs(out - ref)))
    assert err < 5e-2, f"max abs err vs reference: {err}"

    print("KERNEL_OK")
</pallas_src>

<mosaic_0001>
module attributes {stable_mosaic.version = 11 : i64} {
  func.func @k(%arg0: memref<8x128xf32, #tpu.memory_space<vmem>>, %arg1: memref<8x128xf32, #tpu.memory_space<vmem>>) attributes {dimension_semantics = [], scalar_prefetch = 0 : i64, scratch_operands = 0 : i64, tpu.core_type = #tpu.core_type<tc>} {
    %c0 = arith.constant 0 : index
    %c0_0 = arith.constant 0 : index
    %0 = vector.load %arg0[%c0, %c0_0] : memref<8x128xf32, #tpu.memory_space<vmem>>, vector<8x128xf32>
    %c1_i32 = arith.constant 1 : i32
    %1 = tpu.dynamic_rotate %0 by %c1_i32 dim 1 : vector<8x128xf32>, i32 -> vector<8x128xf32>
    %c0_1 = arith.constant 0 : index
    %c0_2 = arith.constant 0 : index
    %2 = vector.load %arg1[%c0_1, %c0_2] : memref<8x128xf32, #tpu.memory_space<vmem>>, vector<8x128xf32>
    tpu.vector_store %arg1[%c0_1, %c0_2], %1 {strides = array<i32>} : memref<8x128xf32, #tpu.memory_space<vmem>>, vector<8x128xf32>,
    return
  }
}

</mosaic_0001>

<llo_original>
// kernel: tpu_custom_call.1
$region0: #{tpu_custom_call.1}
  #allocation0 [shape = 'u32[]', space=smem, size = 0x4, offset = 0x4, fixed_abs, tag = 'smem constant byte address 0x4 - core index']
  #allocation1 [shape = 'u32[144,128]{1,0:T(1,128)}', space=vmem, size = 0x12000, scoped, tag = 'internal scratch']
  %s0 = inlined_call_operand.hbm [shape: f32[8,128], index: 0, kind: input, shape index: {}]
  %s1 = inlined_call_operand.hbm [shape: f32[8,128], index: 1, kind: output, shape index: {}]
  %s2 = sld [smem:[#allocation0]]
  $region18: #{tpu_custom_call.1} parent=0
    _
  %s4 = ssub.s32 1, %s2
  %s5 = scalar_select 0, %s4, %s2
  $region1: #{tpu_custom_call.1} parent=0
    #allocation2 [shape = 'u8[4096]{0}', space=vmem, size = 0x1000, scoped, tag = 'input window, operand 0, single buffered']
    #allocation3 [shape = 's32[1]{0}', space=sflag, size = 0x4, scoped, tag = 'scoped memory for tpu_custom_call.1']
    #allocation4 [shape = 's32[1]{0}', space=sflag, size = 0x4, scoped, tag = 'scoped memory for tpu_custom_call.1']
    #allocation5 [shape = 'u8[4096]{0}', space=vmem, size = 0x1000, scoped, tag = 'output window, operand 0, single buffered']
    %6 = vsyncpa [#allocation3], 0
    %7 = vsyncpa [#allocation4], 0
    // Predicated region
    $region2: #{tpu_custom_call.1} parent=1 // pred_check
      _
    $region3: #{tpu_custom_call.1} parent=1 // pred_check_branch
      %9 = sbr.rel (0) target = $region5
    $region4: #{tpu_custom_call.1} parent=1 // pred_region
      %s11 = ssub.s32 128, 128
      %12 = vsyncadd [#allocation3], %s11
      %s14 = sshll.u32 [#allocation2], 4
      %s15 = int_to_ptr.vmem [resolvable:$true] %s14
      %17 = dma.hbm_to_vmem [thread:$0]  %s0, 128, %s15, [#allocation3]
    $region5: #{tpu_custom_call.1} parent=1 // pred_fallthru
      _
    // Predicated region
    $region6: #{tpu_custom_call.1} parent=1 // pred_check
      _
    $region7: #{tpu_custom_call.1} parent=1 // pred_check_branch
      %19 = sbr.rel (0) target = $region9
    $region8: #{tpu_custom_call.1} parent=1 // pred_region
      %20 = dma.done [#allocation3], 128
    $region9: #{tpu_custom_call.1} parent=1 // pred_fallthru
      _
    %v21 = vld [vmem:[#allocation2] sm:$0xff]
    %22 = vrot.lane.b32.xlu0 %v21, 1
    %v23 = vpop.permute.xlu0 %22
    %24 = vst [vmem:[#allocation5] sm:$0xff] %v23
    // Predicated region
    $region10: #{tpu_custom_call.1} parent=1 // pred_check
      _
    $region11: #{tpu_custom_call.1} parent=1 // pred_check_branch
      %26 = sbr.rel (0) target = $region13
    $region12: #{tpu_custom_call.1} parent=1 // pred_region
      %s28 = ssub.s32 128, 128
      %29 = vsyncadd [#allocation4], %s28
      %s31 = sshll.u32 [#allocation5], 4
      %s32 = int_to_ptr.vmem [resolvable:$true] %s31
      %34 = dma.vmem_to_hbm [thread:$0]  %s32, 128, %s1, [#allocation4]
    $region13: #{tpu_custom_call.1} parent=1 // pred_fallthru
      _
    // Predicated region
    $region14: #{tpu_custom_call.1} parent=1 // pred_check
      _
    $region15: #{tpu_custom_call.1} parent=1 // pred_check_branch
      %36 = sbr.rel (0) target = $region17
    $region16: #{tpu_custom_call.1} parent=1 // pred_region
      %37 = dma.done [#allocation4], 128
    $region17: #{tpu_custom_call.1} parent=1 // pred_fallthru
      _
    %38 = vsyncpa [#allocation3], 1
    %39 = vsyncpa [#allocation4], 1

</llo_original>
